<compile_context>
chip_gen: v6e
topology: v6e:2x2x1
jax: 0.10.0
libtpu: 0.0.40
codegen_flags: <defaults>
</compile_context>

<pallas_src>
import jax
import jax.numpy as jnp
from jax.experimental import pallas as pl
from jax.experimental.pallas import tpu as pltpu


def _identity_dma_kernel(x_hbm_ref, o_hbm_ref, sem):
    # Single HBM->HBM DMA of the whole array: no VMEM staging, no vector
    # load/store traffic, no per-tile grid overhead. This is the roofline for
    # an identity copy on every TPU generation.
    copy = pltpu.make_async_copy(x_hbm_ref, o_hbm_ref, sem)
    copy.start()
    copy.wait()


def _identity_copy_pallas(x):
    """Materialize a fresh buffer equal to x via one HBM->HBM async DMA."""
    nbytes = x.size * jnp.dtype(x.dtype).itemsize
    return pl.pallas_call(
        _identity_dma_kernel,
        out_shape=jax.ShapeDtypeStruct(x.shape, x.dtype),
        in_specs=[pl.BlockSpec(memory_space=pl.ANY)],
        out_specs=pl.BlockSpec(memory_space=pl.ANY),
        scratch_shapes=[pltpu.SemaphoreType.DMA(())],
        cost_estimate=pl.CostEstimate(
            flops=0, transcendentals=0, bytes_accessed=2 * nbytes
        ),
    )(x)


def identity(x, *, force_copy=False, min_pallas_bytes=1 << 20):
    """Identity forward pass (matches nn.Identity semantics).

    Default: return x unchanged — zero cost; JAX arrays are immutable so no
    defensive copy is needed.

    force_copy=True: always return a physically distinct buffer.
      * arrays smaller than `min_pallas_bytes` use a plain XLA copy
        (lower fixed overhead than a pallas_call launch),
      * larger arrays use the HBM->HBM DMA kernel above, which handles
        arbitrary shapes and dtypes with zero VMEM pressure.
    """
    if not force_copy:
        return x
    if x.size == 0:
        return jnp.copy(x)
    nbytes = x.size * jnp.dtype(x.dtype).itemsize
    if nbytes < min_pallas_bytes:
        return jnp.copy(x)
    return _identity_copy_pallas(x)


if __name__ == "__main__":
    key = jax.random.PRNGKey(0)

    # Small NCHW feature map, consistent with the vision model.
    x = jax.random.normal(key, (2, 4, 16, 16), dtype=jnp.float32)

    # 1) Default zero-cost path.
    y_fast = identity(x)
    assert y_fast.shape == x.shape and y_fast.dtype == x.dtype
    assert bool(jnp.all(y_fast == x))

    # 2) force_copy with the small-array XLA bypass (default threshold).
    y_small = jax.block_until_ready(identity(x, force_copy=True))
    assert y_small.shape == x.shape and y_small.dtype == x.dtype
    assert bool(jnp.all(y_small == x))

    # 3) Force the Pallas HBM->HBM DMA kernel path (threshold disabled).
    y_copy = jax.block_until_ready(
        identity(x, force_copy=True, min_pallas_bytes=0))
    assert y_copy.shape == x.shape and y_copy.dtype == x.dtype
    assert bool(jnp.all(y_copy == x))

    # 4) Non-trivial shape through the DMA kernel.
    x2 = jax.random.normal(jax.random.PRNGKey(0), (2, 8, 24, 30),
                           dtype=jnp.float32)
    y2 = jax.block_until_ready(
        identity(x2, force_copy=True, min_pallas_bytes=0))
    assert y2.shape == x2.shape and bool(jnp.all(y2 == x2))

    # 5) Shape not divisible by 128: previously fell back to returning an
    #    alias; now the DMA kernel copies it correctly (fresh buffer).
    x3 = jax.random.normal(jax.random.PRNGKey(0), (2, 3, 5, 7),
                           dtype=jnp.float32)
    y3 = jax.block_until_ready(
        identity(x3, force_copy=True, min_pallas_bytes=0))
    assert y3.shape == x3.shape and bool(jnp.all(y3 == x3))

    print("KERNEL_OK")
</pallas_src>

<mosaic_0001>
module attributes {stable_mosaic.version = 11 : i64} {
  func.func @_identity_dma_kernel(%arg0: memref<2x4x16x16xf32, #tpu.memory_space<any>>, %arg1: memref<2x4x16x16xf32, #tpu.memory_space<any>>, %arg2: memref<!tpu.dma_semaphore, #tpu.memory_space<semaphore_mem>>) attributes {dimension_semantics = [], scalar_prefetch = 0 : i64, scratch_operands = 1 : i64, tpu.core_type = #tpu.core_type<tc>} {
    tpu.enqueue_dma source(%arg0 : memref<2x4x16x16xf32, #tpu.memory_space<any>>) target(%arg1 : memref<2x4x16x16xf32, #tpu.memory_space<any>>) target_semaphore(%arg2 : memref<!tpu.dma_semaphore, #tpu.memory_space<semaphore_mem>>)
    tpu.wait_dma2 semaphore(%arg2 : memref<!tpu.dma_semaphore, #tpu.memory_space<semaphore_mem>>) src(%arg0 : memref<2x4x16x16xf32, #tpu.memory_space<any>>) dst(%arg1 : memref<2x4x16x16xf32, #tpu.memory_space<any>>)
    return
  }
}

</mosaic_0001>

<llo_original>
// kernel: tpu_custom_call.1
$region0: #{tpu_custom_call.1}
  #allocation0 [shape = 'u32[]', space=smem, size = 0x4, offset = 0x4, fixed_abs, tag = 'smem constant byte address 0x4 - core index']
  #allocation1 [shape = 'u32[144,128]{1,0:T(1,128)}', space=vmem, size = 0x12000, scoped, tag = 'internal scratch']
  #allocation2 [shape = 's32[1]{0}', space=sflag, size = 0x4, scoped, tag = 'scratch operand']
  #allocation3 [shape = 's32[]', space=sflag, size = 0x4, offset = 0, fixed_abs, tag = 'sflag constant byte address 0x0 - dummy sync flag']
  #allocation4 [shape = 'u32[0]{0}', space=smem, size = 0, offset = 0, fixed_abs, tag = 'smem constant byte address 0x0 - null']
  %s0 = inlined_call_operand.hbm [shape: f32[2,4,16,16], index: 0, kind: input, shape index: {}]
  %s1 = inlined_call_operand.hbm [shape: f32[2,4,16,16], index: 1, kind: output, shape index: {}]
  %s2 = sld [smem:[#allocation0]]
  $region2: #{tpu_custom_call.1} parent=0
    _
  %s4 = ssub.s32 1, %s2
  %s5 = scalar_select 0, %s4, %s2
  %s7 = sshll.u32 1, 14
  %s8 = sxor.u32 4294967295, %s7
  %12 = dma.general %s0, 2048, %s1, [#allocation2], 131072, [#allocation4], 0, 0
  %s13 = smul.u32 2, 4
  %s14 = smul.u32 %s13, 16
  %s15 = smul.u32 %s14, 1
  %s16 = sshll.u32 %s15, 4
  %17 = dma.done [#allocation2], %s16
  %18 = vsyncmov [#allocation2]
  %s19 = vpop.sfrf %18
  %p20 = scmp.eq.s32.totalorder %s19, 0
  %p21 = pneg %p20
  %23 = shalt.err (%p21)

</llo_original>
